<compile_context>
chip_gen: v7x
topology: tpu7x:2x2x1
jax: 0.10.0
libtpu: 0.0.40
codegen_flags: <defaults>
</compile_context>

<pallas_src>
import functools
import math

import jax
import jax.numpy as jnp
from jax import lax
from jax.experimental import pallas as pl
from jax.experimental.pallas import tpu as pltpu

_SQRT_HALF = 0.7071067811865476  # 1/sqrt(2)


# --------------------------------------------------------------------------- #
# Kernels
# --------------------------------------------------------------------------- #
def _gelu_layernorm(y, b_ref, gamma_ref, beta_ref, eps):
    """f32 epilogue: bias + erf-gelu + LayerNorm over the hidden (last) dim."""
    y = y + b_ref[...].astype(jnp.float32)
    # exact (erf-based) gelu -- matches the PyTorch reference
    y = y * 0.5 * (1.0 + lax.erf(y * jnp.float32(_SQRT_HALF)))
    # One-pass moments: fewer (tm, H) f32 temporaries than a centered slab;
    # clamp guards tiny negative values from f32 cancellation.
    mean = jnp.mean(y, axis=-1, keepdims=True)
    mean_sq = jnp.mean(y * y, axis=-1, keepdims=True)
    var = jnp.maximum(mean_sq - mean * mean, 0.0)
    y = (y - mean) * lax.rsqrt(var + jnp.float32(eps))
    return y * gamma_ref[...].astype(jnp.float32) + beta_ref[...].astype(jnp.float32)


def _kernel_single_k(x_ref, w_ref, b_ref, gamma_ref, beta_ref, o_ref, *,
                     eps, precision):
    # Full hidden-in each step: no accumulator scratch, no zero-init/+= passes.
    y = lax.dot_general(
        x_ref[...], w_ref[...],
        dimension_numbers=(((1,), (1,)), ((), ())),  # x @ W^T, W in (out, in) layout
        preferred_element_type=jnp.float32,
        precision=precision)
    o_ref[...] = _gelu_layernorm(y, b_ref, gamma_ref, beta_ref, eps).astype(o_ref.dtype)


def _kernel_k_tiled(x_ref, w_ref, b_ref, gamma_ref, beta_ref, o_ref, acc_ref, *,
                    eps, precision):
    k = pl.program_id(1)
    part = lax.dot_general(
        x_ref[...], w_ref[...],
        dimension_numbers=(((1,), (1,)), ((), ())),
        preferred_element_type=jnp.float32,
        precision=precision)

    @pl.when(k == 0)
    def _first():
        acc_ref[...] = part            # direct store on the first K step (no zero-init)

    @pl.when(k > 0)
    def _rest():
        acc_ref[...] += part

    @pl.when(k == pl.num_programs(1) - 1)
    def _epilogue():
        o_ref[...] = _gelu_layernorm(acc_ref[...], b_ref, gamma_ref, beta_ref,
                                     eps).astype(o_ref.dtype)


# --------------------------------------------------------------------------- #
# Wrapper
# --------------------------------------------------------------------------- #
def _round_up(x, m):
    return ((x + m - 1) // m) * m


def _cdiv(a, b):
    return (a + b - 1) // b


def _tpu_info():
    """(vmem_capacity_bytes, num_tensorcores_per_chip) with safe fallbacks."""
    vmem_cap = 128 * 1024 * 1024
    try:
        vmem_cap = int(pltpu.get_tpu_info().vmem_capacity_bytes)
    except Exception:
        pass
    kind = ""
    try:
        kind = jax.devices()[0].device_kind.lower()
    except Exception:
        pass
    num_tc = 2 if ("v7" in kind or vmem_cap <= 64 * 1024 * 1024) else 1
    return vmem_cap, num_tc


def visual_prediction_head_transform(hidden_states, dense_w, dense_b, ln_gamma,
                                     ln_beta, *, eps=1e-12, tile_rows=None,
                                     precision=None, cast_matmul_to_bf16=False):
    """hidden_states: [..., H]; dense_w: [H_out, H_in] (PyTorch Linear layout).

    precision: optional lax.Precision for the matmul (pass HIGHEST for
    bit-faithful f32 x @ W^T vs the PyTorch reference).
    cast_matmul_to_bf16: optional numerics tradeoff -- bf16 MXU rate and half
    the weight DMA (accumulation and epilogue stay f32).
    """
    orig_shape = hidden_states.shape
    H = orig_shape[-1]
    x2d = hidden_states.reshape(-1, H)
    N = x2d.shape[0]
    out_dtype = hidden_states.dtype

    if cast_matmul_to_bf16 and x2d.dtype == jnp.float32:
        x2d = x2d.astype(jnp.bfloat16)
        dense_w = dense_w.astype(jnp.bfloat16)

    x_item = jnp.dtype(x2d.dtype).itemsize
    w_item = jnp.dtype(dense_w.dtype).itemsize
    o_item = jnp.dtype(out_dtype).itemsize

    # Generation-aware VMEM budget: v7x has only 64 MiB physical per TC (leave
    # headroom), v5e/v6e have 128 MiB (go bigger than the old 64 MiB cap).
    vmem_cap, num_tc = _tpu_info()
    if vmem_cap <= 64 * 1024 * 1024:          # v7x
        vmem_limit = 48 * 1024 * 1024
        tm_cap = 512
    else:                                     # v5e / v6e
        vmem_limit = 100 * 1024 * 1024
        tm_cap = 1024

    # ---- hidden-in (K) tiling: keep W fully resident whenever it fits -------
    w_budget = vmem_limit // 2
    if H * H * w_item <= w_budget:
        tk = H                                 # full W, loaded from HBM exactly once
    else:
        # Largest lane-legal (128-multiple) divisor of H whose double-buffered
        # (H, tk) slab fits the weight budget.
        tk = 0
        cand = min(((w_budget // (2 * H * w_item)) // 128) * 128, H)
        while cand >= 128:
            if H % cand == 0:
                tk = cand
                break
            cand -= 128
        if tk == 0:
            tk = H  # no lane-legal divisor; fall back to full W (rare / odd H)
    num_k = H // tk

    # ---- row (token) tiling --------------------------------------------------
    sub = {1: 32, 2: 16}.get(x_item, 8)        # dtype-native sublane multiple
    if tile_rows is None:
        tile_rows = tm_cap
    tm = min(_round_up(tile_rows, sub), _round_up(max(N, 1), sub))

    def _vmem_usage(tm_):
        x_buf = tm_ * tk * x_item * 2                       # double-buffered
        w_buf = H * tk * w_item * (1 if num_k == 1 else 2)  # resident vs streamed
        o_buf = tm_ * H * o_item * 2
        acc = 0 if num_k == 1 else tm_ * H * 4
        epi = 2 * tm_ * H * 4                               # epilogue f32 temporaries
        vecs = 3 * max(H, 128) * 4
        return x_buf + w_buf + o_buf + acc + epi + vecs

    while tm > sub and _vmem_usage(tm) > vmem_limit:
        tm = max(_round_up(tm // 2, sub), sub)

    # v7x: keep both TensorCores busy on the "parallel" rows axis.
    if num_tc >= 2 and _cdiv(N, tm) < 2 and N > sub:
        tm = max(_round_up(_cdiv(N, 2), sub), sub)

    # No jnp.pad / slice: cdiv grid; the partial last row block is masked on
    # writeback and gelu/LN are per-row, so garbage rows never reach HBM.
    num_rows = _cdiv(N, tm)

    b2d = dense_b.reshape(1, H)
    g2d = ln_gamma.reshape(1, H)
    be2d = ln_beta.reshape(1, H)

    def _invariant(shape, index_map):
        # Grid-invariant block: one VMEM buffer (double-buffering a constant
        # index block only wastes VMEM).
        return pl.BlockSpec(shape, index_map, pipeline_mode=pl.Buffered(1))

    if num_k == 1:
        kernel = functools.partial(_kernel_single_k, eps=eps, precision=precision)
        grid = (num_rows,)
        in_specs = [
            pl.BlockSpec((tm, H), lambda i: (i, 0)),    # x row tile
            _invariant((H, H), lambda i: (0, 0)),       # W: resident, loaded once
            _invariant((1, H), lambda i: (0, 0)),       # bias
            _invariant((1, H), lambda i: (0, 0)),       # gamma
            _invariant((1, H), lambda i: (0, 0)),       # beta
        ]
        out_specs = pl.BlockSpec((tm, H), lambda i: (i, 0))
        scratch = []
        dims = ("parallel",)
    else:
        kernel = functools.partial(_kernel_k_tiled, eps=eps, precision=precision)
        grid = (num_rows, num_k)
        in_specs = [
            pl.BlockSpec((tm, tk), lambda i, k: (i, k)),   # x tile
            pl.BlockSpec((H, tk), lambda i, k: (0, k)),    # streamed W slab
            _invariant((1, H), lambda i, k: (0, 0)),
            _invariant((1, H), lambda i, k: (0, 0)),
            _invariant((1, H), lambda i, k: (0, 0)),
        ]
        out_specs = pl.BlockSpec((tm, H), lambda i, k: (i, 0))
        scratch = [pltpu.VMEM((tm, H), jnp.float32)]
        dims = ("parallel", "arbitrary")

    out2d = pl.pallas_call(
        kernel,
        out_shape=jax.ShapeDtypeStruct((N, H), out_dtype),
        grid_spec=pltpu.PrefetchScalarGridSpec(
            num_scalar_prefetch=0,
            grid=grid,
            in_specs=in_specs,
            out_specs=out_specs,
            scratch_shapes=scratch),
        compiler_params=pltpu.CompilerParams(
            dimension_semantics=dims,
            vmem_limit_bytes=vmem_limit),
    )(x2d, dense_w, b2d, g2d, be2d)

    return out2d.reshape(orig_shape)


# --------------------------------------------------------------------------- #
# Demo / self-test
# --------------------------------------------------------------------------- #
if __name__ == "__main__":
    # Small config consistent with the module: hidden_size=32, hidden_act='gelu'
    # TODO(synk): H < 128 produces masked (lane-sparse) stores; packing small H
    # into a lane-dense 128 layout would need masked LN stats, so it is left to
    # callers with production hidden sizes (768/1024/... are already lane-dense).
    batch, seq, hidden = 2, 8, 32
    eps = 1e-12

    key = jax.random.PRNGKey(0)
    k_x, k_w, k_b = jax.random.split(key, 3)

    # Deterministic parameter init (nn.Linear-style uniform; LayerNorm: ones/zeros)
    bound = 1.0 / math.sqrt(hidden)
    dense_w = jax.random.uniform(k_w, (hidden, hidden), jnp.float32, -bound, bound)
    dense_b = jax.random.uniform(k_b, (hidden,), jnp.float32, -bound, bound)
    ln_gamma = jnp.ones((hidden,), jnp.float32)
    ln_beta = jnp.zeros((hidden,), jnp.float32)

    x = jax.random.normal(k_x, (batch, seq, hidden), jnp.float32)

    out = visual_prediction_head_transform(x, dense_w, dense_b, ln_gamma, ln_beta,
                                           eps=eps)
    out = jax.block_until_ready(out)

    # Pure-JAX reference for sanity
    y_ref = x @ dense_w.T + dense_b
    y_ref = y_ref * 0.5 * (1.0 + jax.lax.erf(y_ref / jnp.sqrt(2.0)))
    mean = jnp.mean(y_ref, axis=-1, keepdims=True)
    var = jnp.mean((y_ref - mean) ** 2, axis=-1, keepdims=True)
    y_ref = (y_ref - mean) * jax.lax.rsqrt(var + eps) * ln_gamma + ln_beta

    assert out.shape == x.shape
    assert jnp.allclose(out, y_ref, atol=1e-5, rtol=1e-5), "mismatch vs reference"

    print("KERNEL_OK")
</pallas_src>

<mosaic_0001>
module attributes {stable_mosaic.version = 11 : i64} {
  func.func @_kernel_single_k(%arg0: i32, %arg1: memref<16x32xf32, #tpu.memory_space<vmem>>, %arg2: memref<32x32xf32, #tpu.memory_space<vmem>>, %arg3: memref<1x32xf32, #tpu.memory_space<vmem>>, %arg4: memref<1x32xf32, #tpu.memory_space<vmem>>, %arg5: memref<1x32xf32, #tpu.memory_space<vmem>>, %arg6: memref<16x32xf32, #tpu.memory_space<vmem>>) attributes {dimension_semantics = [#tpu.dimension_semantics<parallel>], iteration_bounds = array<i64: 1>, scalar_prefetch = 0 : i64, scratch_operands = 0 : i64, tpu.core_type = #tpu.core_type<tc>, window_params = [{transform_indices = @transform_0, window_bounds = array<i64: 16, 32>}, {pipeline_mode = #tpu.pipeline_mode<synchronous>, transform_indices = @transform_1, window_bounds = array<i64: 32, 32>}, {pipeline_mode = #tpu.pipeline_mode<synchronous>, transform_indices = @transform_2, window_bounds = array<i64: 1, 32>}, {pipeline_mode = #tpu.pipeline_mode<synchronous>, transform_indices = @transform_3, window_bounds = array<i64: 1, 32>}, {pipeline_mode = #tpu.pipeline_mode<synchronous>, transform_indices = @transform_4, window_bounds = array<i64: 1, 32>}, {transform_indices = @transform_5, window_bounds = array<i64: 16, 32>}]} {
    %c0 = arith.constant 0 : index
    %c0_0 = arith.constant 0 : index
    %0 = vector.load %arg1[%c0, %c0_0] : memref<16x32xf32, #tpu.memory_space<vmem>>, vector<16x32xf32>
    %c0_1 = arith.constant 0 : index
    %c0_2 = arith.constant 0 : index
    %1 = vector.load %arg2[%c0_1, %c0_2] : memref<32x32xf32, #tpu.memory_space<vmem>>, vector<32x32xf32>
    %cst = arith.constant dense<0.000000e+00> : vector<16x32xf32>
    %2 = tpu.matmul %0, %1, %cst {dimension_numbers = #tpu.dot_dimension_numbers<[1], [1], [0], [0], [0, 0, 1, 0], [], []>} : vector<16x32xf32>, vector<32x32xf32>, vector<16x32xf32> -> vector<16x32xf32>
    %c0_3 = arith.constant 0 : index
    %c0_4 = arith.constant 0 : index
    %3 = vector.load %arg3[%c0_3, %c0_4] : memref<1x32xf32, #tpu.memory_space<vmem>>, vector<1x32xf32>
    %4 = vector.broadcast %3 : vector<1x32xf32> to vector<16x32xf32>
    %5 = arith.addf %2, %4 : vector<16x32xf32>
    %cst_5 = arith.constant 5.000000e-01 : f32
    %6 = vector.broadcast %cst_5 : f32 to vector<16x32xf32>
    %7 = arith.mulf %5, %6 : vector<16x32xf32>
    %cst_6 = arith.constant 0.707106769 : f32
    %8 = vector.broadcast %cst_6 : f32 to vector<16x32xf32>
    %9 = arith.mulf %5, %8 : vector<16x32xf32>
    %10 = math.erf %9 : vector<16x32xf32>
    %cst_7 = arith.constant 1.000000e+00 : f32
    %11 = vector.broadcast %cst_7 : f32 to vector<16x32xf32>
    %12 = arith.addf %11, %10 : vector<16x32xf32>
    %13 = arith.mulf %7, %12 : vector<16x32xf32>
    %cst_8 = arith.constant dense<0.000000e+00> : vector<16xf32>
    %14 = vector.multi_reduction <add>, %13, %cst_8 [1] : vector<16x32xf32> to vector<16xf32>
    %15 = vector.shape_cast %14 : vector<16xf32> to vector<16x1xf32>
    %cst_9 = arith.constant 3.200000e+01 : f32
    %16 = vector.broadcast %cst_9 : f32 to vector<16x1xf32>
    %17 = arith.divf %15, %16 : vector<16x1xf32>
    %18 = arith.mulf %13, %13 : vector<16x32xf32>
    %cst_10 = arith.constant dense<0.000000e+00> : vector<16xf32>
    %19 = vector.multi_reduction <add>, %18, %cst_10 [1] : vector<16x32xf32> to vector<16xf32>
    %20 = vector.shape_cast %19 : vector<16xf32> to vector<16x1xf32>
    %cst_11 = arith.constant 3.200000e+01 : f32
    %21 = vector.broadcast %cst_11 : f32 to vector<16x1xf32>
    %22 = arith.divf %20, %21 : vector<16x1xf32>
    %23 = arith.mulf %17, %17 : vector<16x1xf32>
    %24 = arith.subf %22, %23 : vector<16x1xf32>
    %cst_12 = arith.constant 0.000000e+00 : f32
    %25 = vector.broadcast %cst_12 : f32 to vector<16x1xf32>
    %26 = arith.maximumf %24, %25 : vector<16x1xf32>
    %27 = vector.broadcast %17 : vector<16x1xf32> to vector<16x32xf32>
    %28 = arith.subf %13, %27 : vector<16x32xf32>
    %cst_13 = arith.constant 9.99999996E-13 : f32
    %29 = vector.broadcast %cst_13 : f32 to vector<16x1xf32>
    %30 = arith.addf %26, %29 : vector<16x1xf32>
    %31 = math.rsqrt %30 : vector<16x1xf32>
    %32 = vector.broadcast %31 : vector<16x1xf32> to vector<16x32xf32>
    %33 = arith.mulf %28, %32 : vector<16x32xf32>
    %c0_14 = arith.constant 0 : index
    %c0_15 = arith.constant 0 : index
    %34 = vector.load %arg4[%c0_14, %c0_15] : memref<1x32xf32, #tpu.memory_space<vmem>>, vector<1x32xf32>
    %35 = vector.broadcast %34 : vector<1x32xf32> to vector<16x32xf32>
    %36 = arith.mulf %33, %35 : vector<16x32xf32>
    %c0_16 = arith.constant 0 : index
    %c0_17 = arith.constant 0 : index
    %37 = vector.load %arg5[%c0_16, %c0_17] : memref<1x32xf32, #tpu.memory_space<vmem>>, vector<1x32xf32>
    %38 = vector.broadcast %37 : vector<1x32xf32> to vector<16x32xf32>
    %39 = arith.addf %36, %38 : vector<16x32xf32>
    %c0_18 = arith.constant 0 : index
    %c0_19 = arith.constant 0 : index
    %40 = vector.load %arg6[%c0_18, %c0_19] : memref<16x32xf32, #tpu.memory_space<vmem>>, vector<16x32xf32>
    tpu.vector_store %arg6[%c0_18, %c0_19], %39 {strides = array<i32>} : memref<16x32xf32, #tpu.memory_space<vmem>>, vector<16x32xf32>,
    return
  }
  func.func @transform_0(%arg0: i32) -> (i32, i32) {
    %c0_i32 = arith.constant 0 : i32
    %c0_i32_0 = arith.constant 0 : i32
    return %arg0, %c0_i32 : i32, i32
  }
  func.func @transform_1(%arg0: i32) -> (i32, i32) {
    %c0_i32 = arith.constant 0 : i32
    %c0_i32_0 = arith.constant 0 : i32
    %c0_i32_1 = arith.constant 0 : i32
    return %c0_i32, %c0_i32_0 : i32, i32
  }
  func.func @transform_2(%arg0: i32) -> (i32, i32) {
    %c0_i32 = arith.constant 0 : i32
    %c0_i32_0 = arith.constant 0 : i32
    %c0_i32_1 = arith.constant 0 : i32
    return %c0_i32, %c0_i32_0 : i32, i32
  }
  func.func @transform_3(%arg0: i32) -> (i32, i32) {
    %c0_i32 = arith.constant 0 : i32
    %c0_i32_0 = arith.constant 0 : i32
    %c0_i32_1 = arith.constant 0 : i32
    return %c0_i32, %c0_i32_0 : i32, i32
  }
  func.func @transform_4(%arg0: i32) -> (i32, i32) {
    %c0_i32 = arith.constant 0 : i32
    %c0_i32_0 = arith.constant 0 : i32
    %c0_i32_1 = arith.constant 0 : i32
    return %c0_i32, %c0_i32_0 : i32, i32
  }
  func.func @transform_5(%arg0: i32) -> (i32, i32) {
    %c0_i32 = arith.constant 0 : i32
    %c0_i32_0 = arith.constant 0 : i32
    return %arg0, %c0_i32 : i32, i32
  }
}

</mosaic_0001>

<llo_original>
// kernel: tpu_custom_call.1
$region0: #{tpu_custom_call.1}
  #allocation0 [shape = 'u32[]', space=smem, size = 0x4, offset = 0x4, fixed_abs, tag = 'smem constant byte address 0x4 - core index']
  #allocation1 [shape = 'u32[144,128]{1,0:T(1,128)}', space=vmem, size = 0x12000, scoped, tag = 'internal scratch']
  %s0 = inlined_call_operand.hbm [shape: f32[16,32], index: 0, kind: input, shape index: {}]
  %s1 = inlined_call_operand.hbm [shape: f32[32,32], index: 1, kind: input, shape index: {}]
  %s2 = inlined_call_operand.hbm [shape: f32[1,32], index: 2, kind: input, shape index: {}]
  %s3 = inlined_call_operand.hbm [shape: f32[1,32], index: 3, kind: input, shape index: {}]
  %s4 = inlined_call_operand.hbm [shape: f32[1,32], index: 4, kind: input, shape index: {}]
  %s5 = inlined_call_operand.hbm [shape: f32[16,32], index: 5, kind: output, shape index: {}]
  %s6 = sld [smem:[#allocation0]]
  $region50: #{tpu_custom_call.1} parent=0
    _
  %s8 = ssub.s32 1, %s6
  %s9 = scalar_select 0, %s8, %s6
  $region1: #{tpu_custom_call.1} parent=0
    #allocation2 [shape = 'u8[8192]{0}', space=vmem, size = 0x2000, scoped, tag = 'input window, operand 0, single buffered']
    #allocation3 [shape = 's32[1]{0}', space=sflag, size = 0x4, scoped, tag = 'scoped memory for tpu_custom_call.1']
    #allocation4 [shape = 's32[1]{0}', space=sflag, size = 0x4, scoped, tag = 'scoped memory for tpu_custom_call.1']
    #allocation5 [shape = 'u8[16384]{0}', space=vmem, size = 0x4000, scoped, tag = 'input window, operand 1, single buffered']
    #allocation6 [shape = 's32[1]{0}', space=sflag, size = 0x4, scoped, tag = 'scoped memory for tpu_custom_call.1']
    #allocation7 [shape = 'u8[512]{0}', space=vmem, size = 0x400, scoped, tag = 'input window, operand 2, single buffered']
    #allocation8 [shape = 'u8[512]{0}', space=vmem, size = 0x400, scoped, tag = 'input window, operand 3, single buffered']
    #allocation9 [shape = 's32[1]{0}', space=sflag, size = 0x4, scoped, tag = 'scoped memory for tpu_custom_call.1']
    #allocation10 [shape = 'u8[512]{0}', space=vmem, size = 0x400, scoped, tag = 'input window, operand 4, single buffered']
    #allocation11 [shape = 'u8[8192]{0}', space=vmem, size = 0x2000, scoped, tag = 'output window, operand 0, single buffered']
    %10 = vsyncpa [#allocation3], 0
    %11 = vsyncpa [#allocation6], 0
    %12 = vsyncpa [#allocation9], 0
    %13 = vsyncpa [#allocation4], 0
    // Predicated region
    $region2: #{tpu_custom_call.1} parent=1 // pred_check
      _
    $region3: #{tpu_custom_call.1} parent=1 // pred_check_branch
      %15 = sbr.rel (0) target = $region5
    $region4: #{tpu_custom_call.1} parent=1 // pred_region
      %s17 = ssub.s32 256, 256
      %18 = vsyncadd [#allocation3], %s17
      %s19 = sshll.u32 [#allocation2], 4
      %s20 = int_to_ptr.vmem [resolvable:$true] %s19
      %25 = dma.hbm_to_vmem [thread:$0]  %s0, 256, %s20, [#allocation3], 128, 128, 8
    $region5: #{tpu_custom_call.1} parent=1 // pred_fallthru
      _
    // Predicated region
    $region6: #{tpu_custom_call.1} parent=1 // pred_check
      _
    $region7: #{tpu_custom_call.1} parent=1 // pred_check_branch
      %27 = sbr.rel (0) target = $region9
    $region8: #{tpu_custom_call.1} parent=1 // pred_region
      %s29 = ssub.s32 512, 512
      %30 = vsyncadd [#allocation6], %s29
      %s31 = sshll.u32 [#allocation5], 4
      %s32 = int_to_ptr.vmem [resolvable:$true] %s31
      %37 = dma.hbm_to_vmem [thread:$0]  %s1, 512, %s32, [#allocation6], 128, 128, 8
    $region9: #{tpu_custom_call.1} parent=1 // pred_fallthru
      _
    // Predicated region
    $region10: #{tpu_custom_call.1} parent=1 // pred_check
      _
    $region11: #{tpu_custom_call.1} parent=1 // pred_check_branch
      %39 = sbr.rel (0) target = $region13
    $region12: #{tpu_custom_call.1} parent=1 // pred_region
      %s41 = ssub.s32 16, 16
      %42 = vsyncadd [#allocation6], %s41
      %s44 = sshll.u32 [#allocation7], 4
      %s45 = int_to_ptr.vmem [resolvable:$true] %s44
      %47 = dma.hbm_to_vmem [thread:$0]  %s2, 16, %s45, [#allocation6]
    $region13: #{tpu_custom_call.1} parent=1 // pred_fallthru
      _
    // Predicated region
    $region14: #{tpu_custom_call.1} parent=1 // pred_check
      _
    $region15: #{tpu_custom_call.1} parent=1 // pred_check_branch
      %49 = sbr.rel (0) target = $region17
    $region16: #{tpu_custom_call.1} parent=1 // pred_region
      %s51 = ssub.s32 16, 16
      %52 = vsyncadd [#allocation9], %s51
      %s54 = sshll.u32 [#allocation8], 4
      %s55 = int_to_ptr.vmem [resolvable:$true] %s54
      %57 = dma.hbm_to_vmem [thread:$0]  %s3, 16, %s55, [#allocation9]
    $region17: #{tpu_custom_call.1} parent=1 // pred_fallthru
      _
    // Predicated region
    $region18: #{tpu_custom_call.1} parent=1 // pred_check
      _
    $region19: #{tpu_custom_call.1} parent=1 // pred_check_branch
      %59 = sbr.rel (0) target = $region21
    $region20: #{tpu_custom_call.1} parent=1 // pred_region
      %s61 = ssub.s32 16, 16
      %62 = vsyncadd [#allocation9], %s61
      %s64 = sshll.u32 [#allocation10], 4
      %s65 = int_to_ptr.vmem [resolvable:$true] %s64
      %67 = dma.hbm_to_vmem [thread:$0]  %s4, 16, %s65, [#allocation9]
    $region21: #{tpu_custom_call.1} parent=1 // pred_fallthru
      _
    // Predicated region
    $region22: #{tpu_custom_call.1} parent=1 // pred_check
      _
    $region23: #{tpu_custom_call.1} parent=1 // pred_check_branch
      %69 = sbr.rel (0) target = $region25
    $region24: #{tpu_custom_call.1} parent=1 // pred_region
      %70 = dma.done [#allocation3], 256
    $region25: #{tpu_custom_call.1} parent=1 // pred_fallthru
      _
    // Predicated region
    $region26: #{tpu_custom_call.1} parent=1 // pred_check
      _
    $region27: #{tpu_custom_call.1} parent=1 // pred_check_branch
      %72 = sbr.rel (0) target = $region29
    $region28: #{tpu_custom_call.1} parent=1 // pred_region
      %73 = dma.done [#allocation6], 512
    $region29: #{tpu_custom_call.1} parent=1 // pred_fallthru
      _
    // Predicated region
    $region30: #{tpu_custom_call.1} parent=1 // pred_check
      _
    $region31: #{tpu_custom_call.1} parent=1 // pred_check_branch
      %75 = sbr.rel (0) target = $region33
    $region32: #{tpu_custom_call.1} parent=1 // pred_region
      %76 = dma.done [#allocation6], 16
    $region33: #{tpu_custom_call.1} parent=1 // pred_fallthru
      _
    // Predicated region
    $region34: #{tpu_custom_call.1} parent=1 // pred_check
      _
    $region35: #{tpu_custom_call.1} parent=1 // pred_check_branch
      %78 = sbr.rel (0) target = $region37
    $region36: #{tpu_custom_call.1} parent=1 // pred_region
      %79 = dma.done [#allocation9], 16
    $region37: #{tpu_custom_call.1} parent=1 // pred_fallthru
      _
    // Predicated region
    $region38: #{tpu_custom_call.1} parent=1 // pred_check
      _
    $region39: #{tpu_custom_call.1} parent=1 // pred_check_branch
      %81 = sbr.rel (0) target = $region41
    $region40: #{tpu_custom_call.1} parent=1 // pred_region
      %82 = dma.done [#allocation9], 16
    $region41: #{tpu_custom_call.1} parent=1 // pred_fallthru
      _
    %v83 = vld [vmem:[#allocation2] sm:$0xff]
    %v84 = vld [vmem:[#allocation2 + $0x8] sm:$0xff]
    %v85 = vld [vmem:[#allocation5] sm:$0xff]
    %v86 = vld [vmem:[#allocation5 + $0x8] sm:$0xff]
    %v87 = vld [vmem:[#allocation5 + $0x10] sm:$0xff]
    %v88 = vld [vmem:[#allocation5 + $0x18] sm:$0xff]
    %v89 = vld [vmem:[#allocation7] sm:$0x1]
    %v91 = vlaneseq
    %v92 = vshrl.u32 %v91, 7
    %v93 = vsub.s32 0, %v92
    %v94 = vrot.slane %v89, %v93
    %vm96 = vcmask 261120
    %v98 = vsel %vm96, %v83, 0
    %v101 = vsel %vm96, %v84, 0
    %v104 = vsel %vm96, %v85, 0
    %v107 = vsel %vm96, %v86, 0
    %v110 = vsel %vm96, %v87, 0
    %v113 = vsel %vm96, %v88, 0
    %115 = vmatprep.subr.mxu0 0.0
    %116 = vmatpush1.xpose.msra.mxu0 %v104
    %117 = vmatprep.subr.mxu0 0.0
    %118 = vmatpush1.xpose.msra.mxu0 %v107
    %119 = vmatprep.subr.mxu0 0.0
    %120 = vmatpush1.xpose.msra.mxu0 %v110
    %121 = vmatprep.subr.mxu0 0.0
    %122 = vmatpush1.xpose.msra.mxu0 %v113
    %123 = vmatprep.subr.mxu0 0.0
    %124 = vmatpush1.xpose.msra.mxu0 0.0
    %125 = vmatprep.subr.mxu0 0.0
    %126 = vmatpush1.xpose.msra.mxu0 0.0
    %127 = vmatprep.subr.mxu0 0.0
    %128 = vmatpush1.xpose.msra.mxu0 0.0
    %129 = vmatprep.subr.mxu0 0.0
    %130 = vmatpush1.xpose.msra.mxu0 0.0
    %131 = vmatprep.subr.mxu0 0.0
    %132 = vmatpush1.xpose.msra.mxu0 0.0
    %133 = vmatprep.subr.mxu0 0.0
    %134 = vmatpush1.xpose.msra.mxu0 0.0
    %135 = vmatprep.subr.mxu0 0.0
    %136 = vmatpush1.xpose.msra.mxu0 0.0
    %137 = vmatprep.subr.mxu0 0.0
    %138 = vmatpush1.xpose.msra.mxu0 0.0
    %139 = vmatprep.subr.mxu0 0.0
    %140 = vmatpush1.xpose.msra.mxu0 0.0
    %141 = vmatprep.subr.mxu0 0.0
    %142 = vmatpush1.xpose.msra.mxu0 0.0
    %143 = vmatprep.subr.mxu0 0.0
    %144 = vmatpush1.xpose.msra.mxu0 0.0
    %145 = vmatprep.subr.mxu0 0.0
    %146 = vmatpush1.xpose.msra.mxu0 0.0
    %147 = vmatprep.subr.mxu0 0.0
    %148 = vmatpush1.xpose.msra.mxu0 0.0
    %149 = vmatprep.subr.mxu0 0.0
    %150 = vmatpush1.xpose.msra.mxu0 0.0
    %151 = vmatprep.subr.mxu0 0.0
    %152 = vmatpush1.xpose.msra.mxu0 0.0
    %153 = vmatprep.subr.mxu0 0.0
    %154 = vmatpush1.xpose.msra.mxu0 0.0
    %155 = vmatprep.subr.mxu0 0.0
    %156 = vmatpush1.xpose.msra.mxu0 0.0
    %157 = vmatprep.subr.mxu0 0.0
    %158 = vmatpush1.xpose.msra.mxu0 0.0
    %159 = vmatprep.subr.mxu0 0.0
    %160 = vmatpush1.xpose.msra.mxu0 0.0
    %161 = vmatprep.subr.mxu0 0.0
    %162 = vmatpush1.xpose.msra.mxu0 0.0
    %163 = vmatprep.subr.mxu0 0.0
    %164 = vmatpush1.xpose.msra.mxu0 0.0
    %165 = vmatprep.subr.mxu0 0.0
    %166 = vmatpush1.xpose.msra.mxu0 0.0
    %167 = vmatprep.subr.mxu0 0.0
    %168 = vmatpush1.xpose.msra.mxu0 0.0
    %169 = vmatprep.subr.mxu0 0.0
    %170 = vmatpush1.xpose.msra.mxu0 0.0
    %171 = vmatprep.subr.mxu0 0.0
    %172 = vmatpush1.xpose.msra.mxu0 0.0
    %173 = vmatprep.subr.mxu0 0.0
    %174 = vmatpush1.xpose.msra.mxu0 0.0
    %175 = vmatprep.subr.mxu0 0.0
    %176 = vmatpush1.xpose.msra.mxu0 0.0
    %177 = vmatprep.subr.mxu0 0.0
    %178 = vmatpush1.xpose.msra.mxu0 0.0
    %179 = vmatprep.mubr.f32.mxu0 0.0
    %180 = vmatmul.mubr.f32.gmra.mrb[0].mxu0 %v98
    %v181 = vpop.f32.mrb[0].mxu0
    %v182 = vadd.f32 %v94, %v181
    %v183 = vpop.f32.mrb[0].mxu0
    %184 = vmatprep.mubr.f32.mxu0 0.0
    %185 = vmatmul.mubr.f32.gmra.mrb[0].mxu0 %v101
    %v186 = vpop.f32.mrb[0].mxu0
    %v187 = vadd.f32 %v94, %v186
    %v188 = vpop.f32.mrb[0].mxu0
    %189 = vdwg.mxu0
    %v190 = vmul.f32 %v182, 0.5
    %v191 = vmul.f32 %v187, 0.5
    %v192 = vmul.f32 %v182, 0.70710677
    %v193 = vmul.f32 %v187, 0.70710677
    %v194 = verf.f32.pop %v192
    %v195 = verf.f32.pop %v193
    %v196 = vadd.f32 %v194, 1.0
    %v197 = vadd.f32 %v195, 1.0
    %v198 = vmul.f32 %v190, %v196
    %v199 = vmul.f32 %v191, %v197
    %v200 = vsel %vm96, %v198, 0.0
    %201 = vadd.xlane.f32.xlu0 %v200
    %v202 = vpop.xlane.xlu0 %201
    %v203 = vsel %vm96, %v199, 0.0
    %204 = vadd.xlane.f32.xlu0 %v203
    %v205 = vpop.xlane.xlu0 %204
    %v206 = vrcp.pop 32.0
    %v207 = vmul.f32 %v202, %v206
    %v208 = vmul.f32 %v205, %v206
    %v209 = vmul.f32 %v198, %v198
    %v210 = vmul.f32 %v199, %v199
    %v211 = vsel %vm96, %v209, 0.0
    %212 = vadd.xlane.f32.xlu0 %v211
    %v213 = vpop.xlane.xlu0 %212
    %v214 = vsel %vm96, %v210, 0.0
    %215 = vadd.xlane.f32.xlu0 %v214
    %v216 = vpop.xlane.xlu0 %215
    %v217 = vmul.f32 %v213, %v206
    %v218 = vmul.f32 %v216, %v206
    %v219 = vmul.f32 %v207, %v207
    %v220 = vmul.f32 %v208, %v208
    %v221 = vsub.f32 %v217, %v219
    %v222 = vsub.f32 %v218, %v220
    %v223 = vmax.f32 %v221, 0.0
    %v224 = vmax.f32 %v222, 0.0
    %v225 = vsub.f32 %v198, %v207
    %v226 = vsub.f32 %v199, %v208
    %v227 = vadd.f32 %v223, 1e-12
    %v228 = vadd.f32 %v224, 1e-12
    %v229 = vrsqrt.pop %v227
    %v230 = vrsqrt.pop %v228
    %v231 = vmul.f32 %v225, %v229
    %v232 = vmul.f32 %v226, %v230
    %v233 = vld [vmem:[#allocation8] sm:$0x1]
    %v235 = vlaneseq
    %v236 = vshrl.u32 %v235, 7
    %v237 = vsub.s32 0, %v236
    %v238 = vrot.slane %v233, %v237
    %v240 = vmul.f32 %v231, %v238
    %v241 = vmul.f32 %v232, %v238
    %v242 = vld [vmem:[#allocation10] sm:$0x1]
    %v244 = vlaneseq
    %v245 = vshrl.u32 %v244, 7
    %v246 = vsub.s32 0, %v245
    %v247 = vrot.slane %v242, %v246
    %v249 = vadd.f32 %v240, %v247
    %v250 = vadd.f32 %v241, %v247
    %251 = vst.msk [vmem:[#allocation11] sm:$0xff] %vm96, %v249
    %252 = vst.msk [vmem:[#allocation11 + $0x8] sm:$0xff] %vm96, %v250
    // Predicated region
    $region42: #{tpu_custom_call.1} parent=1 // pred_check
      _
    $region43: #{tpu_custom_call.1} parent=1 // pred_check_branch
      %254 = sbr.rel (0) target = $region45
    $region44: #{tpu_custom_call.1} parent=1 // pred_region
      %s256 = ssub.s32 256, 256
      %257 = vsyncadd [#allocation4], %s256
      %s258 = sshll.u32 [#allocation11], 4
      %s259 = int_to_ptr.vmem [resolvable:$true] %s258
      %264 = dma.vmem_to_hbm [thread:$0]  %s259, 256, %s5, [#allocation4], 128, 128, 8
    $region45: #{tpu_custom_call.1} parent=1 // pred_fallthru
      _
    // Predicated region
    $region46: #{tpu_custom_call.1} parent=1 // pred_check
      _
    $region47: #{tpu_custom_call.1} parent=1 // pred_check_branch
      %266 = sbr.rel (0) target = $region49
    $region48: #{tpu_custom_call.1} parent=1 // pred_region
      %267 = dma.done [#allocation4], 256
    $region49: #{tpu_custom_call.1} parent=1 // pred_fallthru
      _
    %268 = vsyncpa [#allocation3], 1
    %269 = vsyncpa [#allocation6], 1
    %270 = vsyncpa [#allocation9], 1
    %271 = vsyncpa [#allocation4], 1

</llo_original>
